<compile_context>
chip_gen: v5e
topology: v5e:2x2
jax: 0.10.0
libtpu: 0.0.40
codegen_flags: <defaults>
</compile_context>

<pallas_src>
import jax
import jax.numpy as jnp
from jax.experimental import pallas as pl
from jax.experimental.pallas import tpu as pltpu


def _ewm_kernel(x_ref, wcat_ref, bcat_ref, o_ref):
    x = x_ref[...]
    # One wide matmul on the MXU: (tm, n_in) @ (n_in, 2*n_in) -> (tm, 2*n_in).
    acc = jnp.dot(x, wcat_ref[...], preferred_element_type=jnp.float32)
    acc = acc + bcat_ref[...]
    n_out = o_ref.shape[-1]
    a0 = acc[:, :n_out]          # x @ W0^T + b0
    a1 = acc[:, n_out:]          # x @ W1^T + b1
    o_ref[...] = (a0 * a1).astype(o_ref.dtype)


def _vmem_capacity_bytes() -> int:
    """Physical VMEM of the current chip generation (conservative fallback)."""
    try:
        return int(pltpu.get_tpu_info().vmem_capacity_bytes)
    except Exception:
        return 64 * 1024 * 1024  # v7x per-core VMEM; safe lower bound everywhere


def _pick_block_rows(m, n_in, itemsize, vmem_budget):
    # Grid-invariant VMEM: concatenated weights + bias (budget as if the
    # pipeline still allocates two buffers, even though their index_map is
    # constant across grid steps).
    weight_bytes = 2 * (n_in * 2 * n_in * itemsize + 2 * n_in * 4)
    # Per-row VMEM: x tile (double-buffered) + out tile (double-buffered)
    # + the (tm, 2*n_in) f32 intermediate.
    per_row = 2 * n_in * itemsize + 2 * n_in * itemsize + 2 * n_in * 4
    avail = max(vmem_budget - weight_bytes, 8 * per_row)
    tm_vmem = max(8, avail // per_row)
    # ~6 MiB x-tiles amortize the ~0.35us per-grid-step overhead (85%+ of the
    # measured HBM roofline) without approaching the VMEM budget.
    tm_target = max(8, (6 * 1024 * 1024) // max(n_in * itemsize, 1))
    tm = int(min(tm_vmem, tm_target, m))
    # v7x has 2 TensorCores: keep >= 2 steps on the "parallel" row axis
    # whenever there are enough rows, so the second core is not idle.
    if m >= 16:
        half = ((pl.cdiv(m, 2) + 7) // 8) * 8
        tm = min(tm, half)
    if tm < m:
        tm = max(8, (tm // 8) * 8)  # sublane-aligned when tiling is ragged
    return tm


def element_wise_multiplication(x, w0, b0, w1, b1):
    """Fused (x @ W0^T + b0) * (x @ W1^T + b1).

    x: (..., n_in); w0/w1: (n_in, n_in) in PyTorch (out, in) layout; b0/b1: (n_in,).
    """
    orig_shape = x.shape
    n_in = orig_shape[-1]
    assert w0.shape == (n_in, n_in) and w1.shape == (n_in, n_in)
    assert b0.shape == (n_in,) and b1.shape == (n_in,)

    # Flatten leading dims to rows (view-only reshape).
    x2d = x.reshape(-1, n_in)
    m = x2d.shape[0]
    itemsize = x2d.dtype.itemsize

    # Fuse the two Linears into one wide weight / bias.  The transpose is
    # folded into this single 2*n_in^2 copy (no separate transpose passes).
    w_cat = jnp.concatenate([w0.T, w1.T], axis=1).astype(x.dtype)   # (n_in, 2*n_in)
    b_cat = jnp.concatenate([b0, b1]).reshape(1, 2 * n_in).astype(jnp.float32)

    vmem_cap = _vmem_capacity_bytes()
    vmem_budget = min(vmem_cap // 2, 64 * 1024 * 1024)
    vmem_limit = int(min(vmem_cap * 3 // 4, 96 * 1024 * 1024))

    tm = _pick_block_rows(m, n_in, itemsize, vmem_budget)
    grid = (pl.cdiv(m, tm),)

    cost = pl.CostEstimate(
        flops=4 * m * n_in * n_in + 3 * m * n_in,
        transcendentals=0,
        bytes_accessed=(x2d.size + m * n_in) * itemsize
        + w_cat.size * w_cat.dtype.itemsize
        + b_cat.size * 4,
    )

    out2d = pl.pallas_call(
        _ewm_kernel,
        out_shape=jax.ShapeDtypeStruct((m, n_in), x.dtype),
        grid_spec=pl.GridSpec(
            grid=grid,
            in_specs=[
                pl.BlockSpec((tm, n_in), lambda i: (i, 0)),         # x row tile
                pl.BlockSpec((n_in, 2 * n_in), lambda i: (0, 0)),   # W_cat (VMEM-resident)
                pl.BlockSpec((1, 2 * n_in), lambda i: (0, 0)),      # b_cat (VMEM-resident)
            ],
            out_specs=pl.BlockSpec((tm, n_in), lambda i: (i, 0)),
        ),
        compiler_params=pltpu.CompilerParams(
            dimension_semantics=("parallel",),
            vmem_limit_bytes=vmem_limit,
        ),
        cost_estimate=cost,
    )(x2d, w_cat, b_cat)

    return out2d.reshape(orig_shape)


def element_wise_multiplication_ref(x, w0, b0, w1, b1):
    """Pure-JAX reference mirroring the PyTorch forward."""
    a0 = x @ w0.T + b0
    a1 = x @ w1.T + b1
    return a0 * a1


if __name__ == "__main__":
    key = jax.random.PRNGKey(0)
    k_x, k_w0, k_b0, k_w1, k_b1 = jax.random.split(key, 5)

    n_in = 32
    # Small input consistent with the module: (batch=2, seq=8, hidden=32).
    x = jax.random.normal(k_x, (2, 8, n_in), dtype=jnp.float32)

    # nn.Linear-style init scale: U(-1/sqrt(n_in), 1/sqrt(n_in)).
    bound = 1.0 / (n_in ** 0.5)
    w0 = jax.random.uniform(k_w0, (n_in, n_in), jnp.float32, -bound, bound)
    b0 = jax.random.uniform(k_b0, (n_in,), jnp.float32, -bound, bound)
    w1 = jax.random.uniform(k_w1, (n_in, n_in), jnp.float32, -bound, bound)
    b1 = jax.random.uniform(k_b1, (n_in,), jnp.float32, -bound, bound)

    out = jax.block_until_ready(element_wise_multiplication(x, w0, b0, w1, b1))

    ref = element_wise_multiplication_ref(x, w0, b0, w1, b1)
    assert out.shape == x.shape and out.dtype == x.dtype
    assert jnp.allclose(out, ref, atol=1e-5, rtol=1e-5), "mismatch vs reference"

    print("KERNEL_OK")
</pallas_src>

<mosaic_0001>
module attributes {stable_mosaic.version = 11 : i64} {
  func.func @_ewm_kernel(%arg0: i32, %arg1: memref<8x32xf32, #tpu.memory_space<vmem>>, %arg2: memref<32x64xf32, #tpu.memory_space<vmem>>, %arg3: memref<1x64xf32, #tpu.memory_space<vmem>>, %arg4: memref<8x32xf32, #tpu.memory_space<vmem>>) attributes {dimension_semantics = [#tpu.dimension_semantics<parallel>], iteration_bounds = array<i64: 2>, scalar_prefetch = 0 : i64, scratch_operands = 0 : i64, tpu.core_type = #tpu.core_type<tc>, window_params = [{transform_indices = @transform_0, window_bounds = array<i64: 8, 32>}, {pipeline_mode = #tpu.pipeline_mode<synchronous>, transform_indices = @transform_1, window_bounds = array<i64: 32, 64>}, {pipeline_mode = #tpu.pipeline_mode<synchronous>, transform_indices = @transform_2, window_bounds = array<i64: 1, 64>}, {transform_indices = @transform_3, window_bounds = array<i64: 8, 32>}]} {
    %c0 = arith.constant 0 : index
    %c0_0 = arith.constant 0 : index
    %0 = vector.load %arg1[%c0, %c0_0] : memref<8x32xf32, #tpu.memory_space<vmem>>, vector<8x32xf32>
    %c0_1 = arith.constant 0 : index
    %c0_2 = arith.constant 0 : index
    %1 = vector.load %arg2[%c0_1, %c0_2] : memref<32x64xf32, #tpu.memory_space<vmem>>, vector<32x64xf32>
    %cst = arith.constant dense<0.000000e+00> : vector<8x64xf32>
    %2 = tpu.matmul %0, %1, %cst {dimension_numbers = #tpu.dot_dimension_numbers<[1], [0], [0], [1], [0, 0, 1, 1], [], []>} : vector<8x32xf32>, vector<32x64xf32>, vector<8x64xf32> -> vector<8x64xf32>
    %c0_3 = arith.constant 0 : index
    %c0_4 = arith.constant 0 : index
    %3 = vector.load %arg3[%c0_3, %c0_4] : memref<1x64xf32, #tpu.memory_space<vmem>>, vector<1x64xf32>
    %4 = vector.broadcast %3 : vector<1x64xf32> to vector<8x64xf32>
    %5 = arith.addf %2, %4 : vector<8x64xf32>
    %6 = vector.extract_strided_slice %5 {offsets = [0, 0], sizes = [8, 32], strides = [1, 1]} : vector<8x64xf32> to vector<8x32xf32>
    %7 = vector.extract_strided_slice %5 {offsets = [0, 32], sizes = [8, 32], strides = [1, 1]} : vector<8x64xf32> to vector<8x32xf32>
    %8 = arith.mulf %6, %7 : vector<8x32xf32>
    %c0_5 = arith.constant 0 : index
    %c0_6 = arith.constant 0 : index
    %9 = vector.load %arg4[%c0_5, %c0_6] : memref<8x32xf32, #tpu.memory_space<vmem>>, vector<8x32xf32>
    tpu.vector_store %arg4[%c0_5, %c0_6], %8 {strides = array<i32>} : memref<8x32xf32, #tpu.memory_space<vmem>>, vector<8x32xf32>,
    return
  }
  func.func @transform_0(%arg0: i32) -> (i32, i32) {
    %c0_i32 = arith.constant 0 : i32
    %c0_i32_0 = arith.constant 0 : i32
    return %arg0, %c0_i32 : i32, i32
  }
  func.func @transform_1(%arg0: i32) -> (i32, i32) {
    %c0_i32 = arith.constant 0 : i32
    %c0_i32_0 = arith.constant 0 : i32
    %c0_i32_1 = arith.constant 0 : i32
    return %c0_i32, %c0_i32_0 : i32, i32
  }
  func.func @transform_2(%arg0: i32) -> (i32, i32) {
    %c0_i32 = arith.constant 0 : i32
    %c0_i32_0 = arith.constant 0 : i32
    %c0_i32_1 = arith.constant 0 : i32
    return %c0_i32, %c0_i32_0 : i32, i32
  }
  func.func @transform_3(%arg0: i32) -> (i32, i32) {
    %c0_i32 = arith.constant 0 : i32
    %c0_i32_0 = arith.constant 0 : i32
    return %arg0, %c0_i32 : i32, i32
  }
}

</mosaic_0001>

<llo_original>
// kernel: tpu_custom_call.1
$region0: #{tpu_custom_call.1}
  #allocation0 [shape = 'u32[]', space=smem, size = 0x4, offset = 0x4, fixed_abs, tag = 'smem constant byte address 0x4 - core index']
  #allocation1 [shape = 'u32[72,128]{1,0:T(1,128)}', space=vmem, size = 0x9000, scoped, tag = 'internal scratch']
  %s0 = inlined_call_operand.hbm [shape: f32[16,32], index: 0, kind: input, shape index: {}]
  %s1 = inlined_call_operand.hbm [shape: f32[32,64], index: 1, kind: input, shape index: {}]
  %s2 = inlined_call_operand.vmem [shape: f32[1,64], index: 2, kind: input, shape index: {}]
  %s3 = inlined_call_operand.hbm [shape: f32[16,32], index: 3, kind: output, shape index: {}]
  %s4 = sld [smem:[#allocation0]]
  $region53: #{tpu_custom_call.1} parent=0
    _
  %s6 = ssub.s32 1, %s4
  %s7 = scalar_select 0, %s6, %s4
  $region1: #{tpu_custom_call.1} parent=0
    #allocation2 [shape = 'u8[8192]{0}', space=vmem, size = 0x2000, scoped, tag = 'input window, operand 0']
    #allocation3 [shape = 's32[2]{0}', space=sflag, size = 0x8, scoped, tag = 'scoped memory for tpu_custom_call.1']
    #allocation4 [shape = 's32[2]{0}', space=sflag, size = 0x8, scoped, tag = 'scoped memory for tpu_custom_call.1']
    #allocation5 [shape = 'u8[16384]{0}', space=vmem, size = 0x4000, scoped, tag = 'input window, operand 1, single buffered']
    #allocation6 [shape = 's32[1]{0}', space=sflag, size = 0x4, scoped, tag = 'scoped memory for tpu_custom_call.1']
    #allocation7 [shape = 'u8[8192]{0}', space=vmem, size = 0x2000, scoped, tag = 'output window, operand 0']
    %8 = vsyncpa [#allocation3], 0
    %s9 = scalar_lea.sflag [#allocation3], 1
    %10 = vsyncpa %s9, 0
    %11 = vsyncpa [#allocation6], 0
    %12 = vsyncpa [#allocation4], 0
    %s13 = scalar_lea.sflag [#allocation4], 1
    %14 = vsyncpa %s13, 0
    loop: start=0, step=1, limit=4
    $region2: #{tpu_custom_call.1} parent=1 // loop_pre_header
      _
    $region3: #{tpu_custom_call.1} parent=1 // loop_header
      %s16 = sphi 0, %s20
      %p17 = scmp.ge.s32.totalorder %s16, 4
      %s26 = sphi 0, %s28
      %s29 = sphi 0, %s26
      %s30 = sphi 0, %s29
      %s46 = sphi 0, %s30
      %s50 = sphi 0, %s50
      %s52 = sphi 0, %s50
      %s53 = sphi 0, %s52
      %s67 = sphi 0, %s53
      %s71 = sphi 0, %s71
      %s73 = sphi 0, %s71
      %s74 = sphi 0, %s73
      %s88 = sphi 0, %s74
      %s94 = sphi 0, %s96
      %s97 = sphi 0, %s94
      %s98 = sphi 0, %s97
      %s114 = sphi 0, %s98
    $region4: #{tpu_custom_call.1} parent=1 // loop_header_branch
      %19 = sbr.rel (%p17) target = $region8
    $region5: #{tpu_custom_call.1} parent=1 // loop_body
      %s21 = ssub.s32 %s16, 1
      %s22 = ssub.s32 %s16, 2
      %s23 = sadd.s32 %s16, 1
      %s24 = ssub.s32 %s16, %s23
      %p25 = scmp.eq.s32.totalorder %s24, 0
      %s27 = sadd.s32 %s26, 1
      %s28 = scalar_select %p25, %s26, %s27
      %p31 = pneg %p25
      %p32 = scmp.eq.s32.totalorder %s16, 1
      %p33 = por %p31, %p32
      %p34 = scmp.ne.s32.totalorder %s26, %s29
      %p35 = scmp.eq.s32.totalorder %s16, 0
      %p36 = por %p34, %p35
      %p37 = scmp.ne.s32.totalorder %s26, %s29
      %p38 = scmp.eq.s32.totalorder %s21, 1
      %p39 = por %p37, %p38
      %p40 = scmp.ne.s32.totalorder %s29, %s30
      %p41 = scmp.eq.s32.totalorder %s21, 0
      %p42 = por %p40, %p41
      %p43 = scmp.ne.s32.totalorder %s29, %s30
      %p44 = scmp.eq.s32.totalorder %s22, 1
      %p45 = por %p43, %p44
      %p47 = scmp.ne.s32.totalorder %s30, %s46
      %p48 = scmp.eq.s32.totalorder %s22, 0
      %p49 = por %p47, %p48
      %s51 = sadd.s32 %s50, 1
      %p54 = scmp.eq.s32.totalorder %s16, 1
      %p55 = scmp.ne.s32.totalorder %s50, %s52
      %p56 = scmp.eq.s32.totalorder %s16, 0
      %p57 = por %p55, %p56
      %p58 = scmp.ne.s32.totalorder %s50, %s52
      %p59 = scmp.eq.s32.totalorder %s21, 1
      %p60 = por %p58, %p59
      %p61 = scmp.ne.s32.totalorder %s52, %s53
      %p62 = scmp.eq.s32.totalorder %s21, 0
      %p63 = por %p61, %p62
      %p64 = scmp.ne.s32.totalorder %s52, %s53
      %p65 = scmp.eq.s32.totalorder %s22, 1
      %p66 = por %p64, %p65
      %p68 = scmp.ne.s32.totalorder %s53, %s67
      %p69 = scmp.eq.s32.totalorder %s22, 0
      %p70 = por %p68, %p69
      %s72 = sadd.s32 %s71, 1
      %p75 = scmp.eq.s32.totalorder %s16, 1
      %p76 = scmp.ne.s32.totalorder %s71, %s73
      %p77 = scmp.eq.s32.totalorder %s16, 0
      %p78 = por %p76, %p77
      %p79 = scmp.ne.s32.totalorder %s71, %s73
      %p80 = scmp.eq.s32.totalorder %s21, 1
      %p81 = por %p79, %p80
      %p82 = scmp.ne.s32.totalorder %s73, %s74
      %p83 = scmp.eq.s32.totalorder %s21, 0
      %p84 = por %p82, %p83
      %p85 = scmp.ne.s32.totalorder %s73, %s74
      %p86 = scmp.eq.s32.totalorder %s22, 1
      %p87 = por %p85, %p86
      %p89 = scmp.ne.s32.totalorder %s74, %s88
      %p90 = scmp.eq.s32.totalorder %s22, 0
      %p91 = por %p89, %p90
      %s92 = ssub.s32 %s16, %s23
      %p93 = scmp.eq.s32.totalorder %s92, 0
      %s95 = sadd.s32 %s94, 1
      %s96 = scalar_select %p93, %s94, %s95
      %p99 = pneg %p93
      %p100 = scmp.eq.s32.totalorder %s16, 1
      %p101 = por %p99, %p100
      %p102 = scmp.ne.s32.totalorder %s94, %s97
      %p103 = scmp.eq.s32.totalorder %s16, 0
      %p104 = por %p102, %p103
      %p105 = scmp.ne.s32.totalorder %s94, %s97
      %p106 = scmp.eq.s32.totalorder %s21, 1
      %p107 = por %p105, %p106
      %p108 = scmp.ne.s32.totalorder %s97, %s98
      %p109 = scmp.eq.s32.totalorder %s21, 0
      %p110 = por %p108, %p109
      %p111 = scmp.ne.s32.totalorder %s97, %s98
      %p112 = scmp.eq.s32.totalorder %s22, 1
      %p113 = por %p111, %p112
      %p115 = scmp.ne.s32.totalorder %s98, %s114
      %p116 = scmp.eq.s32.totalorder %s22, 0
      %p117 = por %p115, %p116
      %p118 = scmp.le.s32.totalorder 1, %s16
      %p119 = scmp.lt.s32.totalorder %s16, 3
      %p120 = pnand %p118, %p119
      %p121 = pneg %p120
      // Predicated region
      $region9: #{tpu_custom_call.1} parent=5 // pred_check
        _
      $region10: #{tpu_custom_call.1} parent=5 // pred_check_branch
        %123 = sbr.rel (%p120) target = $region12
      $region11: #{tpu_custom_call.1} parent=5 // pred_region
        %s124 = ssub.s32 %s16, 1
        // Predicated region
        $region13: #{tpu_custom_call.1} parent=11 // pred_check
          %p125 = pneg %p63
        $region14: #{tpu_custom_call.1} parent=11 // pred_check_branch
          %127 = sbr.rel (%p125) target = $region16
        $region15: #{tpu_custom_call.1} parent=11 // pred_region
          %129 = vsyncadd [#allocation6], 0
          %s130 = sshll.u32 %s1, 4
          %s131 = int_to_ptr.hbm [resolvable:$true] %s130
          %s132 = sshll.u32 [#allocation5], 4
          %s133 = int_to_ptr.vmem [resolvable:$true] %s132
          %138 = dma.hbm_to_vmem [thread:$0]  %s131, 512, %s133, [#allocation6], 128, 128, 8
        $region16: #{tpu_custom_call.1} parent=11 // pred_fallthru
          _
        // Predicated region
        $region17: #{tpu_custom_call.1} parent=11 // pred_check
          %p139 = pneg %p84
        $region18: #{tpu_custom_call.1} parent=11 // pred_check_branch
          %141 = sbr.rel (%p139) target = $region20
        $region19: #{tpu_custom_call.1} parent=11 // pred_region
          _
        $region20: #{tpu_custom_call.1} parent=11 // pred_fallthru
          _
      $region12: #{tpu_custom_call.1} parent=5 // pred_fallthru
        _
      %p142 = scmp.lt.s32.totalorder %s16, 2
      // Predicated region
      $region21: #{tpu_custom_call.1} parent=5 // pred_check
        %p143 = pneg %p142
      $region22: #{tpu_custom_call.1} parent=5 // pred_check_branch
        %145 = sbr.rel (%p143) target = $region24
      $region23: #{tpu_custom_call.1} parent=5 // pred_region
        // Predicated region
        $region25: #{tpu_custom_call.1} parent=23 // pred_check
          %p146 = pneg %p36
        $region26: #{tpu_custom_call.1} parent=23 // pred_check_branch
          %148 = sbr.rel (%p146) target = $region28
        $region27: #{tpu_custom_call.1} parent=23 // pred_region
          %s149 = sand.u32 %s26, 1
          %s150 = scalar_lea.sflag [#allocation3], %s149
          %s151 = sand.u32 %s26, 1
          %s152 = smul.addr %s151, 8
          %s153 = scalar_lea.vmem [#allocation2], %s152
          %155 = vsyncadd %s150, 0
          %s156 = smul.addr %s16, 8
          %s157 = scalar_lea.hbm %s0, %s156
          %s159 = sshll.u32 %s157, 4
          %s160 = int_to_ptr.hbm [resolvable:$true] %s159
          %s161 = sshll.u32 %s153, 4
          %s162 = int_to_ptr.vmem [resolvable:$true] %s161
          %164 = dma.hbm_to_vmem [thread:$0]  %s160, 128, %s162, %s150
        $region28: #{tpu_custom_call.1} parent=23 // pred_fallthru
          _
      $region24: #{tpu_custom_call.1} parent=5 // pred_fallthru
        _
      %p165 = scmp.le.s32.totalorder 1, %s16
      %p166 = scmp.lt.s32.totalorder %s16, 3
      %p167 = pnand %p165, %p166
      %p168 = pneg %p167
      // Predicated region
      $region29: #{tpu_custom_call.1} parent=5 // pred_check
        _
      $region30: #{tpu_custom_call.1} parent=5 // pred_check_branch
        %170 = sbr.rel (%p167) target = $region32
      $region31: #{tpu_custom_call.1} parent=5 // pred_region
        %s171 = ssub.s32 %s16, 1
        %s172 = sand.u32 %s29, 1
        %s173 = scalar_lea.sflag [#allocation3], %s172
        %s174 = sand.u32 %s29, 1
        %s175 = smul.addr %s174, 8
        %s176 = scalar_lea.vmem [#allocation2], %s175
        // Predicated region
        $region33: #{tpu_custom_call.1} parent=31 // pred_check
          %p177 = pneg %p42
        $region34: #{tpu_custom_call.1} parent=31 // pred_check_branch
          %179 = sbr.rel (%p177) target = $region36
        $region35: #{tpu_custom_call.1} parent=31 // pred_region
          %181 = dma.done %s173, 128
        $region36: #{tpu_custom_call.1} parent=31 // pred_fallthru
          _
        // Predicated region
        $region37: #{tpu_custom_call.1} parent=31 // pred_check
          %p182 = pneg %p63
        $region38: #{tpu_custom_call.1} parent=31 // pred_check_branch
          %184 = sbr.rel (%p182) target = $region40
        $region39: #{tpu_custom_call.1} parent=31 // pred_region
          %186 = dma.done [#allocation6], 512
        $region40: #{tpu_custom_call.1} parent=31 // pred_fallthru
          _
        %s187 = sand.u32 %s29, 1
        %s188 = scalar_lea.sflag [#allocation3], %s187
        %s189 = sand.u32 %s29, 1
        %s190 = smul.addr %s189, 8
        %s191 = scalar_lea.vmem [#allocation2], %s190
        %p192 = pneg %p42
        %p193 = pneg %p39
        %p194 = pneg %p63
        %p195 = pneg %p60
        %p196 = pneg %p84
        %p197 = pneg %p81
        %p198 = pneg %p110
        %p199 = pneg %p107
        %s200 = sand.u32 %s97, 1
        %s201 = scalar_lea.sflag [#allocation4], %s200
        %s202 = sand.u32 %s97, 1
        %s203 = smul.addr %s202, 8
        %s204 = scalar_lea.vmem [#allocation7], %s203
        %v205 = vld [vmem:[%s176] sm:$0xff]
        %v206 = vld [vmem:[#allocation5] sm:$0xff]
        %v207 = vld [vmem:[#allocation5 + $0x8] sm:$0xff]
        %v208 = vld [vmem:[#allocation5 + $0x10] sm:$0xff]
        %v209 = vld [vmem:[#allocation5 + $0x18] sm:$0xff]
        %v210 = vld [vmem:[%s2] sm:$0x1]
        %v212 = vperm.slane %v210, 0
        %vm214 = vcmask 261120
        %v216 = vsel %vm214, %v205, 0
        %218 = vmatpush.msra.mxu0 0.0
        %219 = vmatpush.msra.mxu0 0.0
        %220 = vmatpush.msra.mxu0 0.0
        %221 = vmatpush.msra.mxu0 0.0
        %222 = vmatpush.msra.mxu0 0.0
        %223 = vmatpush.msra.mxu0 0.0
        %224 = vmatpush.msra.mxu0 0.0
        %225 = vmatpush.msra.mxu0 0.0
        %226 = vmatpush.msra.mxu0 0.0
        %227 = vmatpush.msra.mxu0 0.0
        %228 = vmatpush.msra.mxu0 0.0
        %229 = vmatpush.msra.mxu0 0.0
        %230 = vmatpush.msra.mxu0 %v209
        %231 = vmatpush.msra.mxu0 %v208
        %232 = vmatpush.msra.mxu0 %v207
        %233 = vmatpush.msra.mxu0 %v206
        %234 = vmatmul.f32.gmra.mxu0 %v216
        %v235 = vpop.f32.mrf.mxu0
        %v236 = vadd.f32 %v212, %v235
        %237 = vdwg.mxu0
        %239 = vrot.lane.b32.xlu0 %v236, 96
        %v240 = vpop.permute.xlu0 %239
        %v242 = vmul.f32 %v236, %v240
        %243 = vst.msk [vmem:[%s204] sm:$0xff] %vm214, %v242
        %s244 = sand.u32 %s97, 1
        %s245 = scalar_lea.sflag [#allocation4], %s244
        %s246 = sand.u32 %s97, 1
        %s247 = smul.addr %s246, 8
        %s248 = scalar_lea.vmem [#allocation7], %s247
        // Predicated region
        $region41: #{tpu_custom_call.1} parent=31 // pred_check
          %p249 = pneg %p107
        $region42: #{tpu_custom_call.1} parent=31 // pred_check_branch
          %251 = sbr.rel (%p249) target = $region44
        $region43: #{tpu_custom_call.1} parent=31 // pred_region
          %253 = vsyncadd %s245, 0
          %s254 = smul.addr %s21, 8
          %s255 = scalar_lea.hbm %s3, %s254
          %s257 = sshll.u32 %s248, 4
          %s258 = int_to_ptr.vmem [resolvable:$true] %s257
          %s259 = sshll.u32 %s255, 4
          %s260 = int_to_ptr.hbm [resolvable:$true] %s259
          %262 = dma.vmem_to_hbm [thread:$0]  %s258, 128, %s260, %s245
        $region44: #{tpu_custom_call.1} parent=31 // pred_fallthru
          _
      $region32: #{tpu_custom_call.1} parent=5 // pred_fallthru
        _
      %p263 = scmp.le.s32.totalorder 2, %s16
      // Predicated region
      $region45: #{tpu_custom_call.1} parent=5 // pred_check
        %p264 = pneg %p263
      $region46: #{tpu_custom_call.1} parent=5 // pred_check_branch
        %266 = sbr.rel (%p264) target = $region48
      $region47: #{tpu_custom_call.1} parent=5 // pred_region
        %s267 = ssub.s32 %s16, 2
        // Predicated region
        $region49: #{tpu_custom_call.1} parent=47 // pred_check
          %p268 = pneg %p113
        $region50: #{tpu_custom_call.1} parent=47 // pred_check_branch
          %270 = sbr.rel (%p268) target = $region52
        $region51: #{tpu_custom_call.1} parent=47 // pred_region
          %s271 = sand.u32 %s98, 1
          %s272 = scalar_lea.sflag [#allocation4], %s271
          %s273 = sand.u32 %s98, 1
          %s274 = smul.addr %s273, 8
          %s275 = scalar_lea.vmem [#allocation7], %s274
          %277 = dma.done %s272, 128
        $region52: #{tpu_custom_call.1} parent=47 // pred_fallthru
          _
      $region48: #{tpu_custom_call.1} parent=5 // pred_fallthru
        _
    $region6: #{tpu_custom_call.1} parent=1 // loop_footer
      %s20 = sadd.s32 1, %s16
    $region7: #{tpu_custom_call.1} parent=1 // loop_footer_branch
      %15 = sbr.rel target = $region3
    $region8: #{tpu_custom_call.1} parent=1 // loop_exit
      _
    %278 = vsyncpa [#allocation3], 1
    %s279 = scalar_lea.sflag [#allocation3], 1
    %280 = vsyncpa %s279, 1
    %281 = vsyncpa [#allocation6], 1
    %282 = vsyncpa [#allocation4], 1
    %s283 = scalar_lea.sflag [#allocation4], 1
    %284 = vsyncpa %s283, 1

</llo_original>
